<compile_context>
chip_gen: v7x
topology: tpu7x:2x2x1
jax: 0.10.0
libtpu: 0.0.40
codegen_flags: <defaults>
</compile_context>

<pallas_src>
import functools

import jax
import jax.numpy as jnp
import numpy as np
from jax.experimental import pallas as pl
from jax.experimental.pallas import tpu as pltpu


def _round_up(x, m):
    return ((x + m - 1) // m) * m


# ------------------------------ Pallas kernel -------------------------------

def _fused_down_kernel(x_ref, w1_ref, b1_ref, w2_ref, b2_ref, y_ref, pool_ref,
                       *, K, pad_l):
    """Fused DoubleConv1D + ReLU + MaxPool1d(2) for B_tile batch elements.

    x_ref   : (B_tile, Cin,  L)      input block (NCL)
    w1_ref  : (Cout_p, K*Cin_p)      conv1 weights (bf16, zero-padded)
    b1_ref  : (Cout_p, 1)            f32, zero-padded
    w2_ref  : (Cout_p, K*Cout_p)     conv2 weights (bf16, zero-padded)
    b2_ref  : (Cout_p, 1)            f32, zero-padded
    y_ref   : (B_tile, Cout, L)      double-conv output (pre-pool)
    pool_ref: (B_tile, Cout, L//2)   maxpool output
    """
    B, Cin, L = x_ref.shape
    Cout = y_ref.shape[1]
    Lh = pool_ref.shape[2]
    Cin_p = w1_ref.shape[1] // K
    Cout_p = w1_ref.shape[0]
    Lb = B * L
    mx_dtype = w1_ref.dtype
    f32 = jnp.float32

    # ---- fold the B batch elements into one (Cin_p, B*L) f32 slab ----------
    rows = [x_ref[b].astype(f32) for b in range(B)]
    x2d = rows[0] if B == 1 else jnp.concatenate(rows, axis=1)
    if Cin_p > Cin:
        x2d = jnp.concatenate([x2d, jnp.zeros((Cin_p - Cin, Lb), f32)], axis=0)

    # ---- per-tap 'same'-padding halo masks (shared by both convs) ----------
    pos = jax.lax.broadcasted_iota(jnp.int32, (1, Lb), 1)
    if B > 1:
        pos = pos % L                 # position inside each batch element
    taps = []
    for k in range(K):
        s = k - pad_l
        if s == 0:
            taps.append((s, None))
        elif s < 0:
            taps.append((s, pos >= (-s)))     # left halo lanes -> 0
        else:
            taps.append((s, pos < (L - s)))   # right halo lanes -> 0

    def im2col(v):
        # v: (C, Lb) f32 -> (K*C, Lb); row k*C+i holds v[i, . + (k - pad_l)],
        # with halo / cross-batch lanes zeroed.  pltpu.roll keeps everything
        # lane-resident (no padded scratch, no shifted reloads).
        parts = []
        for s, valid in taps:
            if s == 0:
                parts.append(v)
            else:
                shifted = pltpu.roll(v, (-s) % Lb, axis=1)
                parts.append(jnp.where(valid, shifted, 0.0))
        return jnp.concatenate(parts, axis=0)

    # ---- conv1 + ReLU: one im2col matmul (bf16 operands, f32 accumulate) ---
    h1 = jnp.dot(w1_ref[...], im2col(x2d).astype(mx_dtype),
                 preferred_element_type=f32)
    h1 = jnp.maximum(h1 + b1_ref[...], 0.0)           # (Cout_p, B*L), f32

    # ---- conv2 + ReLU straight from the resident h1 (no scratch round-trip)
    y2 = jnp.dot(w2_ref[...], im2col(h1).astype(mx_dtype),
                 preferred_element_type=f32)
    y2 = jnp.maximum(y2 + b2_ref[...], 0.0)           # (Cout_p, B*L), f32

    # ---- write the pre-pool output (NCL layout) -----------------------------
    for b in range(B):
        y_ref[b] = y2[:Cout, b * L:(b + 1) * L].astype(y_ref.dtype)

    # ---- fused MaxPool1d(kernel_size=2, stride=2) along L -------------------
    # TODO(synk): replace the transpose + sublane pair-reduce with a lane
    #             deinterleave (even/odd lane max) once a robust value-level
    #             strided lane slice / gather is available.
    if L % 2 == 0:
        y_lc = y2.T                                    # (B*L, Cout_p)
        pooled = jnp.max(y_lc.reshape(Lb // 2, 2, Cout_p), axis=1).T
        for b in range(B):
            pool_ref[b] = pooled[:Cout, b * Lh:(b + 1) * Lh].astype(pool_ref.dtype)
    else:  # odd L: PyTorch floor behavior, pair within each batch element
        for b in range(B):
            blk = y2[:, b * L:b * L + 2 * Lh].T        # (2*Lh, Cout_p)
            pooled = jnp.max(blk.reshape(Lh, 2, Cout_p), axis=1).T
            pool_ref[b] = pooled[:Cout, :].astype(pool_ref.dtype)


# ------------------------------ JAX wrapper ----------------------------------

def _vmem_cap_bytes():
    # ~75% of physical VMEM (v5e/v6e: 128 MiB -> 96 MiB, v7x: 64 MiB -> 48 MiB)
    # so the compiler keeps headroom for its internal scratch.
    try:
        return int(pltpu.get_tpu_info().vmem_capacity_bytes) * 3 // 4
    except Exception:
        return 48 * 1024 * 1024


@functools.partial(jax.jit, static_argnames=("matmul_dtype",))
def downsample_1d_block(x_ncl, w1, b1, w2, b2, *, matmul_dtype=jnp.bfloat16):
    """Forward of DownSample1DBlock (eval mode).

    x_ncl: (N, Cin, L)   [PyTorch NCL layout]
    w1   : (K, Cin, Cout),  b1: (Cout,)
    w2   : (K, Cout, Cout), b2: (Cout,)
    Returns (x, pool) in NCL layout: (N, Cout, L), (N, Cout, L//2).
    """
    N, Cin, L = x_ncl.shape
    K, _, Cout = w1.shape
    Lh = L // 2
    pad_l = (K - 1) // 2

    # Sublane-aligned channel counts (zero-padded weight rows/cols).
    Cin_p = _round_up(Cin, 8)
    Cout_p = _round_up(Cout, 8)

    # Fold several batch elements per grid step (largest divisor of N whose
    # folded lane count stays near the 512-lane sweet spot).
    lane_target = 512
    B_tile = 1
    for cand in range(1, N + 1):
        if N % cand == 0 and cand * L <= max(L, lane_target):
            B_tile = cand
    Lb = B_tile * L

    # One-off weight repack: (K, Cin, Cout) -> (Cout_p, K*Cin_p) bf16,
    # zero-padded (padded bias rows are zero too -> padded channels stay 0).
    w1p = jnp.pad(w1, ((0, 0), (0, Cin_p - Cin), (0, Cout_p - Cout)))
    w1_mat = jnp.transpose(w1p, (2, 0, 1)).reshape(Cout_p, K * Cin_p)
    w1_mat = w1_mat.astype(matmul_dtype)
    w2p = jnp.pad(w2, ((0, 0), (0, Cout_p - Cout), (0, Cout_p - Cout)))
    w2_mat = jnp.transpose(w2p, (2, 0, 1)).reshape(Cout_p, K * Cout_p)
    w2_mat = w2_mat.astype(matmul_dtype)
    b1_col = jnp.pad(b1, (0, Cout_p - Cout)).reshape(Cout_p, 1).astype(jnp.float32)
    b2_col = jnp.pad(b2, (0, Cout_p - Cout)).reshape(Cout_p, 1).astype(jnp.float32)

    kernel = functools.partial(_fused_down_kernel, K=K, pad_l=pad_l)

    # VMEM budget at actual dtypes (I/O blocks double-buffered by Pallas).
    io_b = x_ncl.dtype.itemsize
    mx_b = jnp.dtype(matmul_dtype).itemsize
    est = (2 * B_tile * Cin * L * io_b                        # x block
           + 2 * B_tile * Cout * (L + Lh) * io_b              # y + pool blocks
           + 2 * K * Cout_p * (Cin_p + Cout_p) * mx_b         # weights
           + 4 * Cout_p * 4                                   # biases
           + K * (Cin_p + Cout_p) * Lb * (4 + mx_b)           # im2col temps
           + 4 * Cout_p * Lb * 4                              # h1/y2/pool temps
           + Cin_p * Lb * 4)                                  # folded input
    vmem_limit = int(min(_vmem_cap_bytes(), max(16 * 1024 * 1024, 2 * est)))

    y, pool = pl.pallas_call(
        kernel,
        out_shape=(
            jax.ShapeDtypeStruct((N, Cout, L), x_ncl.dtype),
            jax.ShapeDtypeStruct((N, Cout, Lh), x_ncl.dtype),
        ),
        grid=(N // B_tile,),
        in_specs=[
            pl.BlockSpec((B_tile, Cin, L), lambda n: (n, 0, 0)),
            pl.BlockSpec((Cout_p, K * Cin_p), lambda n: (0, 0)),
            pl.BlockSpec((Cout_p, 1), lambda n: (0, 0)),
            pl.BlockSpec((Cout_p, K * Cout_p), lambda n: (0, 0)),
            pl.BlockSpec((Cout_p, 1), lambda n: (0, 0)),
        ],
        out_specs=[
            pl.BlockSpec((B_tile, Cout, L), lambda n: (n, 0, 0)),
            pl.BlockSpec((B_tile, Cout, Lh), lambda n: (n, 0, 0)),
        ],
        compiler_params=pltpu.CompilerParams(
            dimension_semantics=("parallel",),
            vmem_limit_bytes=vmem_limit),
    )(x_ncl, w1_mat, b1_col, w2_mat, b2_col)

    # Dropout in eval mode == identity on `pool`.
    return y, pool


# ------------------------------ reference -----------------------------------

def _ref_forward(x_ncl, w1, b1, w2, b2):
    """Pure-JAX f32 reference: Conv1d('same')+ReLU twice, then MaxPool1d(2)."""
    def conv_relu(x, w_klc, b):
        w_oik = jnp.transpose(w_klc, (2, 1, 0))     # (O, I, K)
        y = jax.lax.conv_general_dilated(
            x, w_oik, window_strides=(1,), padding="SAME",
            dimension_numbers=("NCH", "OIH", "NCH"))
        return jnp.maximum(y + b[None, :, None], 0.0)

    h = conv_relu(x_ncl, w1, b1)
    y = conv_relu(h, w2, b2)
    N, C, L = y.shape
    pool = jnp.max(y[:, :, :2 * (L // 2)].reshape(N, C, L // 2, 2), axis=-1)
    return y, pool


# --------------------------------- main --------------------------------------

if __name__ == "__main__":
    key = jax.random.PRNGKey(0)
    k_x, k_w1, k_b1, k_w2, k_b2 = jax.random.split(key, 5)

    N, Cin, Cout, L, K = 2, 4, 8, 16, 3

    x = jax.random.normal(k_x, (N, Cin, L), dtype=jnp.float32)

    # Deterministic parameter init (uniform, PyTorch-like fan-in bound).
    bound1 = 1.0 / np.sqrt(Cin * K)
    w1 = jax.random.uniform(k_w1, (K, Cin, Cout), jnp.float32, -bound1, bound1)
    b1 = jax.random.uniform(k_b1, (Cout,), jnp.float32, -bound1, bound1)
    bound2 = 1.0 / np.sqrt(Cout * K)
    w2 = jax.random.uniform(k_w2, (K, Cout, Cout), jnp.float32, -bound2, bound2)
    b2 = jax.random.uniform(k_b2, (Cout,), jnp.float32, -bound2, bound2)

    y, pool = downsample_1d_block(x, w1, b1, w2, b2)
    jax.block_until_ready((y, pool))

    # bf16 MXU operands (f32 accumulation) -> compare at bf16-level tolerance.
    y_ref, pool_ref = _ref_forward(x, w1, b1, w2, b2)
    np.testing.assert_allclose(np.asarray(y), np.asarray(y_ref),
                               rtol=2e-2, atol=2e-2)
    np.testing.assert_allclose(np.asarray(pool), np.asarray(pool_ref),
                               rtol=2e-2, atol=2e-2)

    assert y.shape == (N, Cout, L) and pool.shape == (N, Cout, L // 2)
    print("KERNEL_OK")
</pallas_src>

<mosaic_0001>
module attributes {stable_mosaic.version = 11 : i64} {
  func.func @_fused_down_kernel(%arg0: i32, %arg1: memref<2x4x16xf32, #tpu.memory_space<vmem>>, %arg2: memref<8x24xbf16, #tpu.memory_space<vmem>>, %arg3: memref<8x1xf32, #tpu.memory_space<vmem>>, %arg4: memref<8x24xbf16, #tpu.memory_space<vmem>>, %arg5: memref<8x1xf32, #tpu.memory_space<vmem>>, %arg6: memref<2x8x16xf32, #tpu.memory_space<vmem>>, %arg7: memref<2x8x8xf32, #tpu.memory_space<vmem>>) attributes {dimension_semantics = [#tpu.dimension_semantics<parallel>], iteration_bounds = array<i64: 1>, scalar_prefetch = 0 : i64, scratch_operands = 0 : i64, tpu.core_type = #tpu.core_type<tc>, window_params = [{transform_indices = @transform_0, window_bounds = array<i64: 2, 4, 16>}, {pipeline_mode = #tpu.pipeline_mode<synchronous>, transform_indices = @transform_1, window_bounds = array<i64: 8, 24>}, {pipeline_mode = #tpu.pipeline_mode<synchronous>, transform_indices = @transform_2, window_bounds = array<i64: 8, 1>}, {pipeline_mode = #tpu.pipeline_mode<synchronous>, transform_indices = @transform_3, window_bounds = array<i64: 8, 24>}, {pipeline_mode = #tpu.pipeline_mode<synchronous>, transform_indices = @transform_4, window_bounds = array<i64: 8, 1>}, {transform_indices = @transform_5, window_bounds = array<i64: 2, 8, 16>}, {transform_indices = @transform_6, window_bounds = array<i64: 2, 8, 8>}]} {
    %c0 = arith.constant 0 : index
    %c0_0 = arith.constant 0 : index
    %c0_1 = arith.constant 0 : index
    %0 = vector.load %arg1[%c0, %c0_0, %c0_1] : memref<2x4x16xf32, #tpu.memory_space<vmem>>, vector<1x4x16xf32>
    %1 = vector.shape_cast %0 : vector<1x4x16xf32> to vector<4x16xf32>
    %c1 = arith.constant 1 : index
    %c0_2 = arith.constant 0 : index
    %c0_3 = arith.constant 0 : index
    %2 = vector.load %arg1[%c1, %c0_2, %c0_3] : memref<2x4x16xf32, #tpu.memory_space<vmem>>, vector<1x4x16xf32>
    %3 = vector.shape_cast %2 : vector<1x4x16xf32> to vector<4x16xf32>
    %4 = tpu.concatenate %1, %3 in 1 : vector<4x16xf32>, vector<4x16xf32> -> vector<4x32xf32>
    %cst = arith.constant 0.000000e+00 : f32
    %5 = vector.broadcast %cst : f32 to vector<4x32xf32>
    %6 = tpu.concatenate %4, %5 in 0 : vector<4x32xf32>, vector<4x32xf32> -> vector<8x32xf32>
    %7 = tpu.iota {dimensions = array<i32: 1>} : vector<1x32xi32>
    %c16_i32 = arith.constant 16 : i32
    %c0_i32 = arith.constant 0 : i32
    %8 = arith.cmpi eq, %c16_i32, %c0_i32 : i32
    %c1_i32 = arith.constant 1 : i32
    %9 = arith.select %8, %c1_i32, %c16_i32 : i32
    %10 = vector.broadcast %9 : i32 to vector<1x32xi32>
    %11 = arith.remsi %7, %10 : vector<1x32xi32>
    %c0_i32_4 = arith.constant 0 : i32
    %12 = vector.broadcast %c0_i32_4 : i32 to vector<1x32xi32>
    %13 = arith.cmpi ne, %11, %12 : vector<1x32xi32>
    %c0_i32_5 = arith.constant 0 : i32
    %14 = vector.broadcast %c0_i32_5 : i32 to vector<1x32xi32>
    %15 = arith.cmpi slt, %11, %14 : vector<1x32xi32>
    %c0_i32_6 = arith.constant 0 : i32
    %16 = arith.cmpi slt, %9, %c0_i32_6 : i32
    %17 = vector.broadcast %16 : i1 to vector<1x32xi1>
    %18 = vector.broadcast %17 : vector<1x32xi1> to vector<1x32xi1>
    %19 = arith.xori %15, %18 : vector<1x32xi1>
    %20 = arith.andi %19, %13 : vector<1x32xi1>
    %21 = vector.broadcast %9 : i32 to vector<1x32xi32>
    %22 = arith.addi %11, %21 : vector<1x32xi32>
    %23 = arith.select %20, %22, %11 : vector<1x32xi1>, vector<1x32xi32>
    %c1_i32_7 = arith.constant 1 : i32
    %24 = vector.broadcast %c1_i32_7 : i32 to vector<1x32xi32>
    %25 = arith.cmpi sge, %23, %24 : vector<1x32xi32>
    %c15_i32 = arith.constant 15 : i32
    %26 = vector.broadcast %c15_i32 : i32 to vector<1x32xi32>
    %27 = arith.cmpi slt, %23, %26 : vector<1x32xi32>
    %c0_8 = arith.constant 0 : index
    %c0_9 = arith.constant 0 : index
    %28 = vector.load %arg2[%c0_8, %c0_9] : memref<8x24xbf16, #tpu.memory_space<vmem>>, vector<8x24xbf16>
    %c1_i32_10 = arith.constant 1 : i32
    %29 = tpu.dynamic_rotate %6 by %c1_i32_10 dim 1 : vector<8x32xf32>, i32 -> vector<8x32xf32>
    %cst_11 = arith.constant 0.000000e+00 : f32
    %30 = vector.shape_cast %25 : vector<1x32xi1> to vector<1x32xi1>
    %31 = vector.broadcast %30 : vector<1x32xi1> to vector<8x32xi1>
    %32 = vector.broadcast %cst_11 : f32 to vector<8x32xf32>
    %33 = arith.select %31, %29, %32 : vector<8x32xi1>, vector<8x32xf32>
    %c31_i32 = arith.constant 31 : i32
    %34 = tpu.dynamic_rotate %6 by %c31_i32 dim 1 : vector<8x32xf32>, i32 -> vector<8x32xf32>
    %cst_12 = arith.constant 0.000000e+00 : f32
    %35 = vector.shape_cast %27 : vector<1x32xi1> to vector<1x32xi1>
    %36 = vector.broadcast %35 : vector<1x32xi1> to vector<8x32xi1>
    %37 = vector.broadcast %cst_12 : f32 to vector<8x32xf32>
    %38 = arith.select %36, %34, %37 : vector<8x32xi1>, vector<8x32xf32>
    %39 = tpu.concatenate %33, %6, %38 in 0 : vector<8x32xf32>, vector<8x32xf32>, vector<8x32xf32> -> vector<24x32xf32>
    %40 = arith.truncf %39 : vector<24x32xf32> to vector<24x32xbf16>
    %cst_13 = arith.constant dense<0.000000e+00> : vector<8x32xf32>
    %41 = tpu.matmul %28, %40, %cst_13 {dimension_numbers = #tpu.dot_dimension_numbers<[1], [0], [0], [1], [0, 0, 1, 1], [], []>} : vector<8x24xbf16>, vector<24x32xbf16>, vector<8x32xf32> -> vector<8x32xf32>
    %c0_14 = arith.constant 0 : index
    %c0_15 = arith.constant 0 : index
    %42 = vector.load %arg3[%c0_14, %c0_15] : memref<8x1xf32, #tpu.memory_space<vmem>>, vector<8x1xf32>
    %43 = vector.broadcast %42 : vector<8x1xf32> to vector<8x32xf32>
    %44 = arith.addf %41, %43 : vector<8x32xf32>
    %cst_16 = arith.constant 0.000000e+00 : f32
    %45 = vector.broadcast %cst_16 : f32 to vector<8x32xf32>
    %46 = arith.maximumf %44, %45 : vector<8x32xf32>
    %c0_17 = arith.constant 0 : index
    %c0_18 = arith.constant 0 : index
    %47 = vector.load %arg4[%c0_17, %c0_18] : memref<8x24xbf16, #tpu.memory_space<vmem>>, vector<8x24xbf16>
    %c1_i32_19 = arith.constant 1 : i32
    %48 = tpu.dynamic_rotate %46 by %c1_i32_19 dim 1 : vector<8x32xf32>, i32 -> vector<8x32xf32>
    %cst_20 = arith.constant 0.000000e+00 : f32
    %49 = vector.shape_cast %25 : vector<1x32xi1> to vector<1x32xi1>
    %50 = vector.broadcast %49 : vector<1x32xi1> to vector<8x32xi1>
    %51 = vector.broadcast %cst_20 : f32 to vector<8x32xf32>
    %52 = arith.select %50, %48, %51 : vector<8x32xi1>, vector<8x32xf32>
    %c31_i32_21 = arith.constant 31 : i32
    %53 = tpu.dynamic_rotate %46 by %c31_i32_21 dim 1 : vector<8x32xf32>, i32 -> vector<8x32xf32>
    %cst_22 = arith.constant 0.000000e+00 : f32
    %54 = vector.shape_cast %27 : vector<1x32xi1> to vector<1x32xi1>
    %55 = vector.broadcast %54 : vector<1x32xi1> to vector<8x32xi1>
    %56 = vector.broadcast %cst_22 : f32 to vector<8x32xf32>
    %57 = arith.select %55, %53, %56 : vector<8x32xi1>, vector<8x32xf32>
    %58 = tpu.concatenate %52, %46, %57 in 0 : vector<8x32xf32>, vector<8x32xf32>, vector<8x32xf32> -> vector<24x32xf32>
    %59 = arith.truncf %58 : vector<24x32xf32> to vector<24x32xbf16>
    %cst_23 = arith.constant dense<0.000000e+00> : vector<8x32xf32>
    %60 = tpu.matmul %47, %59, %cst_23 {dimension_numbers = #tpu.dot_dimension_numbers<[1], [0], [0], [1], [0, 0, 1, 1], [], []>} : vector<8x24xbf16>, vector<24x32xbf16>, vector<8x32xf32> -> vector<8x32xf32>
    %c0_24 = arith.constant 0 : index
    %c0_25 = arith.constant 0 : index
    %61 = vector.load %arg5[%c0_24, %c0_25] : memref<8x1xf32, #tpu.memory_space<vmem>>, vector<8x1xf32>
    %62 = vector.broadcast %61 : vector<8x1xf32> to vector<8x32xf32>
    %63 = arith.addf %60, %62 : vector<8x32xf32>
    %cst_26 = arith.constant 0.000000e+00 : f32
    %64 = vector.broadcast %cst_26 : f32 to vector<8x32xf32>
    %65 = arith.maximumf %63, %64 : vector<8x32xf32>
    %66 = vector.extract_strided_slice %65 {offsets = [0, 0], sizes = [8, 16], strides = [1, 1]} : vector<8x32xf32> to vector<8x16xf32>
    %c0_27 = arith.constant 0 : index
    %c0_28 = arith.constant 0 : index
    %c0_29 = arith.constant 0 : index
    %67 = vector.load %arg6[%c0_27, %c0_28, %c0_29] : memref<2x8x16xf32, #tpu.memory_space<vmem>>, vector<1x8x16xf32>
    %68 = vector.shape_cast %67 : vector<1x8x16xf32> to vector<8x16xf32>
    %69 = vector.shape_cast %66 : vector<8x16xf32> to vector<1x8x16xf32>
    tpu.vector_store %arg6[%c0_27, %c0_28, %c0_29], %69 {strides = array<i32>} : memref<2x8x16xf32, #tpu.memory_space<vmem>>, vector<1x8x16xf32>,
    %70 = vector.extract_strided_slice %65 {offsets = [0, 16], sizes = [8, 16], strides = [1, 1]} : vector<8x32xf32> to vector<8x16xf32>
    %c1_30 = arith.constant 1 : index
    %c0_31 = arith.constant 0 : index
    %c0_32 = arith.constant 0 : index
    %71 = vector.load %arg6[%c1_30, %c0_31, %c0_32] : memref<2x8x16xf32, #tpu.memory_space<vmem>>, vector<1x8x16xf32>
    %72 = vector.shape_cast %71 : vector<1x8x16xf32> to vector<8x16xf32>
    %73 = vector.shape_cast %70 : vector<8x16xf32> to vector<1x8x16xf32>
    tpu.vector_store %arg6[%c1_30, %c0_31, %c0_32], %73 {strides = array<i32>} : memref<2x8x16xf32, #tpu.memory_space<vmem>>, vector<1x8x16xf32>,
    %74 = tpu.transpose %65, [1, 0] : vector<8x32xf32> -> vector<32x8xf32>
    %75 = vector.shape_cast %74 : vector<32x8xf32> to vector<16x2x8xf32>
    %cst_33 = arith.constant dense<0xFF800000> : vector<16x8xf32>
    %76 = vector.multi_reduction <maximumf>, %75, %cst_33 [1] : vector<16x2x8xf32> to vector<16x8xf32>
    %77 = tpu.transpose %76, [1, 0] : vector<16x8xf32> -> vector<8x16xf32>
    %78 = vector.extract_strided_slice %77 {offsets = [0, 0], sizes = [8, 8], strides = [1, 1]} : vector<8x16xf32> to vector<8x8xf32>
    %c0_34 = arith.constant 0 : index
    %c0_35 = arith.constant 0 : index
    %c0_36 = arith.constant 0 : index
    %79 = vector.load %arg7[%c0_34, %c0_35, %c0_36] : memref<2x8x8xf32, #tpu.memory_space<vmem>>, vector<1x8x8xf32>
    %80 = vector.shape_cast %79 : vector<1x8x8xf32> to vector<8x8xf32>
    %81 = vector.shape_cast %78 : vector<8x8xf32> to vector<1x8x8xf32>
    tpu.vector_store %arg7[%c0_34, %c0_35, %c0_36], %81 {strides = array<i32>} : memref<2x8x8xf32, #tpu.memory_space<vmem>>, vector<1x8x8xf32>,
    %82 = vector.extract_strided_slice %77 {offsets = [0, 8], sizes = [8, 8], strides = [1, 1]} : vector<8x16xf32> to vector<8x8xf32>
    %c1_37 = arith.constant 1 : index
    %c0_38 = arith.constant 0 : index
    %c0_39 = arith.constant 0 : index
    %83 = vector.load %arg7[%c1_37, %c0_38, %c0_39] : memref<2x8x8xf32, #tpu.memory_space<vmem>>, vector<1x8x8xf32>
    %84 = vector.shape_cast %83 : vector<1x8x8xf32> to vector<8x8xf32>
    %85 = vector.shape_cast %82 : vector<8x8xf32> to vector<1x8x8xf32>
    tpu.vector_store %arg7[%c1_37, %c0_38, %c0_39], %85 {strides = array<i32>} : memref<2x8x8xf32, #tpu.memory_space<vmem>>, vector<1x8x8xf32>,
    return
  }
  func.func @transform_0(%arg0: i32) -> (i32, i32, i32) {
    %c0_i32 = arith.constant 0 : i32
    %c0_i32_0 = arith.constant 0 : i32
    %c0_i32_1 = arith.constant 0 : i32
    return %arg0, %c0_i32, %c0_i32_0 : i32, i32, i32
  }
  func.func @transform_1(%arg0: i32) -> (i32, i32) {
    %c0_i32 = arith.constant 0 : i32
    %c0_i32_0 = arith.constant 0 : i32
    %c0_i32_1 = arith.constant 0 : i32
    return %c0_i32, %c0_i32_0 : i32, i32
  }
  func.func @transform_2(%arg0: i32) -> (i32, i32) {
    %c0_i32 = arith.constant 0 : i32
    %c0_i32_0 = arith.constant 0 : i32
    %c0_i32_1 = arith.constant 0 : i32
    return %c0_i32, %c0_i32_0 : i32, i32
  }
  func.func @transform_3(%arg0: i32) -> (i32, i32) {
    %c0_i32 = arith.constant 0 : i32
    %c0_i32_0 = arith.constant 0 : i32
    %c0_i32_1 = arith.constant 0 : i32
    return %c0_i32, %c0_i32_0 : i32, i32
  }
  func.func @transform_4(%arg0: i32) -> (i32, i32) {
    %c0_i32 = arith.constant 0 : i32
    %c0_i32_0 = arith.constant 0 : i32
    %c0_i32_1 = arith.constant 0 : i32
    return %c0_i32, %c0_i32_0 : i32, i32
  }
  func.func @transform_5(%arg0: i32) -> (i32, i32, i32) {
    %c0_i32 = arith.constant 0 : i32
    %c0_i32_0 = arith.constant 0 : i32
    %c0_i32_1 = arith.constant 0 : i32
    return %arg0, %c0_i32, %c0_i32_0 : i32, i32, i32
  }
  func.func @transform_6(%arg0: i32) -> (i32, i32, i32) {
    %c0_i32 = arith.constant 0 : i32
    %c0_i32_0 = arith.constant 0 : i32
    %c0_i32_1 = arith.constant 0 : i32
    return %arg0, %c0_i32, %c0_i32_0 : i32, i32, i32
  }
}

</mosaic_0001>

<llo_original>
// kernel: downsample_1d_block.1
$region0: #{downsample_1d_block.1}
  #allocation0 [shape = 'u32[]', space=smem, size = 0x4, offset = 0x4, fixed_abs, tag = 'smem constant byte address 0x4 - core index']
  #allocation1 [shape = 'u32[144,128]{1,0:T(1,128)}', space=vmem, size = 0x12000, scoped, tag = 'internal scratch']
  %s0 = inlined_call_operand.vmem [shape: f32[2,4,16], index: 0, kind: input, shape index: {}]
  %s1 = inlined_call_operand.vmem [shape: bf16[8,24], index: 1, kind: input, shape index: {}]
  %s2 = inlined_call_operand.vmem [shape: f32[8,1], index: 2, kind: input, shape index: {}]
  %s3 = inlined_call_operand.vmem [shape: bf16[8,24], index: 3, kind: input, shape index: {}]
  %s4 = inlined_call_operand.vmem [shape: f32[8,1], index: 4, kind: input, shape index: {}]
  %s5 = inlined_call_operand.hbm [shape: f32[2,8,16], index: 5, kind: output, shape index: {0}]
  %s6 = inlined_call_operand.hbm [shape: f32[2,8,8], index: 6, kind: output, shape index: {1}]
  %7 = xla_tuple %s5, %s6
  %s8 = sld [smem:[#allocation0]]
  $region38: #{downsample_1d_block.1} parent=0
    _
  %s10 = ssub.s32 1, %s8
  %s11 = scalar_select 0, %s10, %s8
  $region1: #{downsample_1d_block.1} parent=0
    #allocation2 [shape = 'u8[8192]{0}', space=vmem, size = 0x2000, scoped, tag = 'output window, operand 0, single buffered']
    #allocation3 [shape = 's32[1]{0}', space=sflag, size = 0x4, scoped, tag = 'scoped memory for downsample_1d_block.1']
    #allocation4 [shape = 'u8[8192]{0}', space=vmem, size = 0x2000, scoped, tag = 'output window, operand 1, single buffered']
    #allocation5 [shape = 's32[1]{0}', space=sflag, size = 0x4, scoped, tag = 'scoped memory for downsample_1d_block.1']
    %12 = vsyncpa [#allocation3], 0
    %13 = vsyncpa [#allocation5], 0
    // Predicated region
    $region2: #{downsample_1d_block.1} parent=1 // pred_check
      _
    $region3: #{downsample_1d_block.1} parent=1 // pred_check_branch
      %15 = sbr.rel (0) target = $region5
    $region4: #{downsample_1d_block.1} parent=1 // pred_region
      _
    $region5: #{downsample_1d_block.1} parent=1 // pred_fallthru
      _
    // Predicated region
    $region6: #{downsample_1d_block.1} parent=1 // pred_check
      _
    $region7: #{downsample_1d_block.1} parent=1 // pred_check_branch
      %17 = sbr.rel (0) target = $region9
    $region8: #{downsample_1d_block.1} parent=1 // pred_region
      _
    $region9: #{downsample_1d_block.1} parent=1 // pred_fallthru
      _
    // Predicated region
    $region10: #{downsample_1d_block.1} parent=1 // pred_check
      _
    $region11: #{downsample_1d_block.1} parent=1 // pred_check_branch
      %19 = sbr.rel (0) target = $region13
    $region12: #{downsample_1d_block.1} parent=1 // pred_region
      _
    $region13: #{downsample_1d_block.1} parent=1 // pred_fallthru
      _
    // Predicated region
    $region14: #{downsample_1d_block.1} parent=1 // pred_check
      _
    $region15: #{downsample_1d_block.1} parent=1 // pred_check_branch
      %21 = sbr.rel (0) target = $region17
    $region16: #{downsample_1d_block.1} parent=1 // pred_region
      _
    $region17: #{downsample_1d_block.1} parent=1 // pred_fallthru
      _
    // Predicated region
    $region18: #{downsample_1d_block.1} parent=1 // pred_check
      _
    $region19: #{downsample_1d_block.1} parent=1 // pred_check_branch
      %23 = sbr.rel (0) target = $region21
    $region20: #{downsample_1d_block.1} parent=1 // pred_region
      _
    $region21: #{downsample_1d_block.1} parent=1 // pred_fallthru
      _
    %v25 = vld [vmem:[%s0] sm:$0xf]
    %s26 = scalar_lea.vmem %s0, 4
    %v27 = vld [vmem:[%s26] sm:$0xf]
    %29 = vrot.lane.b32.xlu0 %v27, 16
    %v30 = vpop.permute.xlu0 %29
    %vm32 = vcmask 130048
    %v33 = vsel %vm32, %v25, %v30
    %vm34 = vcmask 1043456
    %v35 = vsel %vm34, %v33, 0.0
    %v36 = vlaneseq
    %v37 = vand.u32 %v36, 127
    %vm38 = vcmp.lt.s32.totalorder %v37, 0
    %v39 = vsub.s32 0, %v37
    %v40 = vsel %vm38, %v39, %v37
    %v41 = vshrl.u32 %v40, 4
    %v42 = vand.u32 %v40, 15
    %v43 = vsub.s32 0, %v42
    %v44 = vsel %vm38, %v43, %v42
    %vm45 = vcmp.ne.s32.totalorder %v44, 0
    %vm46 = vcmp.lt.s32.totalorder %v44, 0
    %vm47 = vmand %vm46, %vm45
    %v48 = vadd.s32 %v44, 16
    %v49 = vsel %vm47, %v48, %v44
    %vm50 = vcmp.ge.s32.totalorder %v49, 1
    %vm51 = vcmp.lt.s32.totalorder %v49, 15
    %v52 = vld [vmem:[%s1] sm:$0xf]
    %vm53 = vcmask 1047808
    %54 = vrot.lane.b32.xlu0 %v35, 32
    %v55 = vpop.permute.xlu0 %54
    %v56 = vsel %vm53, %v55, %v35
    %57 = vrot.lane.b32.xlu0 %v56, 32
    %v58 = vpop.permute.xlu0 %57
    %v59 = vsel %vm53, %v58, %v35
    %v60 = vsel %vm50, 1, 0
    %vm61 = vcmp.eq.s32.totalorder %v60, 1
    %63 = vrot.lane.b32.xlu0 %v59, 97
    %v64 = vpop.permute.xlu0 %63
    %v66 = vsel %vm61, %v64, 0.0
    %v67 = vsel %vm51, 1, 0
    %vm68 = vcmp.eq.s32.totalorder %v67, 1
    %69 = vrot.lane.b32.xlu0 %v59, 127
    %v70 = vpop.permute.xlu0 %69
    %v72 = vsel %vm68, %v70, 0.0
    %v73 = vpack.c.bf16 %v35, %v66
    %v74 = vpack.c.bf16 %v72, %v72
    %v75 = vld [vmem:[%s2] sm:$0xff]
    %77 = vset.pattern.permute.xlu0 0
    %78 = vperm.xlu0 %77, %v75
    %v79 = vpop.permute.xlu0 %78
    %vm81 = vcmask 195584
    %v83 = vsel %vm81, %v52, 0
    %v86 = vsel %vm34, %v74, 0
    %88 = vmatprep.subr.bf16.mxu0 0
    %89 = vmatpush1.bf16.msra.mxu0 %v73
    %90 = vmatprep.subr.bf16.mxu0 0
    %91 = vmatpush1.bf16.msra.mxu0 %v86
    %92 = vmatprep.subr.bf16.mxu0 0
    %93 = vmatpush1.bf16.msra.mxu0 0
    %94 = vmatprep.subr.bf16.mxu0 0
    %95 = vmatpush1.bf16.msra.mxu0 0
    %96 = vmatprep.subr.bf16.mxu0 0
    %97 = vmatpush1.bf16.msra.mxu0 0
    %98 = vmatprep.subr.bf16.mxu0 0
    %99 = vmatpush1.bf16.msra.mxu0 0
    %100 = vmatprep.subr.bf16.mxu0 0
    %101 = vmatpush1.bf16.msra.mxu0 0
    %102 = vmatprep.subr.bf16.mxu0 0
    %103 = vmatpush1.bf16.msra.mxu0 0
    %104 = vmatprep.subr.bf16.mxu0 0
    %105 = vmatpush1.bf16.msra.mxu0 0
    %106 = vmatprep.subr.bf16.mxu0 0
    %107 = vmatpush1.bf16.msra.mxu0 0
    %108 = vmatprep.subr.bf16.mxu0 0
    %109 = vmatpush1.bf16.msra.mxu0 0
    %110 = vmatprep.subr.bf16.mxu0 0
    %111 = vmatpush1.bf16.msra.mxu0 0
    %112 = vmatprep.subr.bf16.mxu0 0
    %113 = vmatpush1.bf16.msra.mxu0 0
    %114 = vmatprep.subr.bf16.mxu0 0
    %115 = vmatpush1.bf16.msra.mxu0 0
    %116 = vmatprep.subr.bf16.mxu0 0
    %117 = vmatpush1.bf16.msra.mxu0 0
    %118 = vmatprep.subr.bf16.mxu0 0
    %119 = vmatpush1.bf16.msra.mxu0 0
    %120 = vmatprep.mubr.bf16.mxu0 0
    %121 = vmatmul.mubr.bf16.gmra.mrb[0].mxu0 %v83
    %v122 = vpop.f32.mrb[0].mxu0
    %v123 = vadd.f32 %v79, %v122
    %v124 = vpop.f32.mrb[0].mxu0
    %v125 = vpop.f32.mrb[0].mxu0
    %v126 = vpop.f32.mrb[0].mxu0
    %127 = vdwg.mxu0
    %v128 = vmax.f32 %v123, 0.0
    %v129 = vld [vmem:[%s3] sm:$0xf]
    %130 = vrot.lane.b32.xlu0 %v128, 32
    %v131 = vpop.permute.xlu0 %130
    %v132 = vsel %vm53, %v131, %v128
    %133 = vrot.lane.b32.xlu0 %v132, 32
    %v134 = vpop.permute.xlu0 %133
    %v135 = vsel %vm53, %v134, %v128
    %137 = vrot.lane.b32.xlu0 %v135, 97
    %v138 = vpop.permute.xlu0 %137
    %v140 = vsel %vm61, %v138, 0.0
    %141 = vrot.lane.b32.xlu0 %v135, 127
    %v142 = vpop.permute.xlu0 %141
    %v144 = vsel %vm68, %v142, 0.0
    %v145 = vpack.c.bf16 %v128, %v140
    %v146 = vpack.c.bf16 %v144, %v144
    %v147 = vld [vmem:[%s4] sm:$0xff]
    %149 = vset.pattern.permute.xlu0 0
    %150 = vperm.xlu0 %149, %v147
    %v151 = vpop.permute.xlu0 %150
    %v154 = vsel %vm81, %v129, 0
    %v157 = vsel %vm34, %v146, 0
    %159 = vmatprep.subr.bf16.mxu0 0
    %160 = vmatpush1.bf16.msra.mxu0 %v145
    %161 = vmatprep.subr.bf16.mxu0 0
    %162 = vmatpush1.bf16.msra.mxu0 %v157
    %163 = vmatprep.subr.bf16.mxu0 0
    %164 = vmatpush1.bf16.msra.mxu0 0
    %165 = vmatprep.subr.bf16.mxu0 0
    %166 = vmatpush1.bf16.msra.mxu0 0
    %167 = vmatprep.subr.bf16.mxu0 0
    %168 = vmatpush1.bf16.msra.mxu0 0
    %169 = vmatprep.subr.bf16.mxu0 0
    %170 = vmatpush1.bf16.msra.mxu0 0
    %171 = vmatprep.subr.bf16.mxu0 0
    %172 = vmatpush1.bf16.msra.mxu0 0
    %173 = vmatprep.subr.bf16.mxu0 0
    %174 = vmatpush1.bf16.msra.mxu0 0
    %175 = vmatprep.subr.bf16.mxu0 0
    %176 = vmatpush1.bf16.msra.mxu0 0
    %177 = vmatprep.subr.bf16.mxu0 0
    %178 = vmatpush1.bf16.msra.mxu0 0
    %179 = vmatprep.subr.bf16.mxu0 0
    %180 = vmatpush1.bf16.msra.mxu0 0
    %181 = vmatprep.subr.bf16.mxu0 0
    %182 = vmatpush1.bf16.msra.mxu0 0
    %183 = vmatprep.subr.bf16.mxu0 0
    %184 = vmatpush1.bf16.msra.mxu0 0
    %185 = vmatprep.subr.bf16.mxu0 0
    %186 = vmatpush1.bf16.msra.mxu0 0
    %187 = vmatprep.subr.bf16.mxu0 0
    %188 = vmatpush1.bf16.msra.mxu0 0
    %189 = vmatprep.subr.bf16.mxu0 0
    %190 = vmatpush1.bf16.msra.mxu0 0
    %191 = vmatprep.mubr.bf16.mxu0 0
    %192 = vmatmul.mubr.bf16.gmra.mrb[0].mxu0 %v154
    %v193 = vpop.f32.mrb[0].mxu0
    %v194 = vadd.f32 %v151, %v193
    %v195 = vpop.f32.mrb[0].mxu0
    %v196 = vpop.f32.mrb[0].mxu0
    %v197 = vpop.f32.mrb[0].mxu0
    %198 = vdwg.mxu0
    %v199 = vmax.f32 %v194, 0.0
    %200 = vst.msk [vmem:[#allocation2] sm:$0xff] %vm32, %v199
    %202 = vrot.lane.b32.xlu0 %v199, 112
    %v203 = vpop.permute.xlu0 %202
    %s205 = scalar_lea.vmem [#allocation2], 8
    %206 = vst.msk [vmem:[%s205] sm:$0xff] %vm32, %v203
    %207 = vxpose.xlu0.b32.start [1/16] %v199, 128
    %208 = vxpose.xlu0.b32.cont [2/16] 0.0, 128
    %209 = vxpose.xlu0.b32.cont [3/16] 0.0, 128
    %210 = vxpose.xlu0.b32.cont [4/16] 0.0, 128
    %211 = vxpose.xlu0.b32.cont [5/16] 0.0, 128
    %212 = vxpose.xlu0.b32.cont [6/16] 0.0, 128
    %213 = vxpose.xlu0.b32.cont [7/16] 0.0, 128
    %214 = vxpose.xlu0.b32.cont [8/16] 0.0, 128
    %215 = vxpose.xlu0.b32.cont [9/16] 0.0, 128
    %216 = vxpose.xlu0.b32.cont [10/16] 0.0, 128
    %217 = vxpose.xlu0.b32.cont [11/16] 0.0, 128
    %218 = vxpose.xlu0.b32.cont [12/16] 0.0, 128
    %219 = vxpose.xlu0.b32.cont [13/16] 0.0, 128
    %220 = vxpose.xlu0.b32.cont [14/16] 0.0, 128
    %221 = vxpose.xlu0.b32.cont [15/16] 0.0, 128
    %222 = vxpose.xlu0.b32.end [16/16] 0.0, 128
    %v223 = vpop.trf.xlu0
    %v224 = vpop.trf.xlu0
    %v225 = vpop.trf.xlu0
    %v226 = vpop.trf.xlu0
    %v227 = vpop.trf.xlu0
    %v228 = vpop.trf.xlu0
    %v229 = vpop.trf.xlu0
    %v230 = vpop.trf.xlu0
    %v231 = vpop.trf.xlu0
    %v232 = vpop.trf.xlu0
    %v233 = vpop.trf.xlu0
    %v234 = vpop.trf.xlu0
    %v235 = vpop.trf.xlu0
    %v236 = vpop.trf.xlu0
    %v237 = vpop.trf.xlu0
    %v238 = vpop.trf.xlu0
    %v243 = vcombine.high %v223, %v223
    %v245 = vunpack.c.l.s4 1983009808
    %v246 = vunpack.c.0.s8 %v245
    %v247 = vlaneseq
    %v248 = vshrl.u32 %v247, 7
    %v249 = vsub.s32 %v246, %v248
    %v250 = vrot.slane %v223, %v249
    %v252 = vunpack.c.l.s4 1983009808
    %v253 = vunpack.c.0.s8 %v252
    %v254 = vlaneseq
    %v255 = vshrl.u32 %v254, 7
    %v256 = vsub.s32 %v253, %v255
    %v257 = vrot.slane %v243, %v256
    %v258 = vcombine.high %v250, %v250
    %v259 = vcombine.high %v257, %v257
    %v260 = vcombine.high %v224, %v224
    %v262 = vunpack.c.l.s4 1983009808
    %v263 = vunpack.c.0.s8 %v262
    %v264 = vlaneseq
    %v265 = vshrl.u32 %v264, 7
    %v266 = vsub.s32 %v263, %v265
    %v267 = vrot.slane %v224, %v266
    %v269 = vunpack.c.l.s4 1983009808
    %v270 = vunpack.c.0.s8 %v269
    %v271 = vlaneseq
    %v272 = vshrl.u32 %v271, 7
    %v273 = vsub.s32 %v270, %v272
    %v274 = vrot.slane %v260, %v273
    %v275 = vcombine.high %v267, %v267
    %v276 = vcombine.high %v274, %v274
    %v277 = vcombine.high %v225, %v225
    %v279 = vunpack.c.l.s4 1983009808
    %v280 = vunpack.c.0.s8 %v279
    %v281 = vlaneseq
    %v282 = vshrl.u32 %v281, 7
    %v283 = vsub.s32 %v280, %v282
    %v284 = vrot.slane %v225, %v283
    %v286 = vunpack.c.l.s4 1983009808
    %v287 = vunpack.c.0.s8 %v286
    %v288 = vlaneseq
    %v289 = vshrl.u32 %v288, 7
    %v290 = vsub.s32 %v287, %v289
    %v291 = vrot.slane %v277, %v290
    %v292 = vcombine.high %v284, %v284
    %v293 = vcombine.high %v291, %v291
    %v294 = vcombine.high %v226, %v226
    %v296 = vunpack.c.l.s4 1983009808
    %v297 = vunpack.c.0.s8 %v296
    %v298 = vlaneseq
    %v299 = vshrl.u32 %v298, 7
    %v300 = vsub.s32 %v297, %v299
    %v301 = vrot.slane %v226, %v300
    %v303 = vunpack.c.l.s4 1983009808
    %v304 = vunpack.c.0.s8 %v303
    %v305 = vlaneseq
    %v306 = vshrl.u32 %v305, 7
    %v307 = vsub.s32 %v304, %v306
    %v308 = vrot.slane %v294, %v307
    %v309 = vcombine.high %v301, %v301
    %v310 = vcombine.high %v308, %v308
    %vm327 = vcmask 58368
    %v328 = vsel %vm327, %v250, -inf
    %v329 = vrot.slane %v328, 4
    %v330 = vmax.f32 %v328, %v329
    %v331 = vrot.slane %v330, 2
    %v332 = vmax.f32 %v330, %v331
    %v333 = vrot.slane %v332, 1
    %v334 = vmax.f32 %v332, %v333
    %v335 = vsel %vm327, %v258, -inf
    %v336 = vrot.slane %v335, 4
    %v337 = vmax.f32 %v335, %v336
    %v338 = vrot.slane %v337, 2
    %v339 = vmax.f32 %v337, %v338
    %v340 = vrot.slane %v339, 1
    %v341 = vmax.f32 %v339, %v340
    %v342 = vsel %vm327, %v257, -inf
    %v343 = vrot.slane %v342, 4
    %v344 = vmax.f32 %v342, %v343
    %v345 = vrot.slane %v344, 2
    %v346 = vmax.f32 %v344, %v345
    %v347 = vrot.slane %v346, 1
    %v348 = vmax.f32 %v346, %v347
    %v349 = vsel %vm327, %v259, -inf
    %v350 = vrot.slane %v349, 4
    %v351 = vmax.f32 %v349, %v350
    %v352 = vrot.slane %v351, 2
    %v353 = vmax.f32 %v351, %v352
    %v354 = vrot.slane %v353, 1
    %v355 = vmax.f32 %v353, %v354
    %v356 = vsel %vm327, %v267, -inf
    %v357 = vrot.slane %v356, 4
    %v358 = vmax.f32 %v356, %v357
    %v359 = vrot.slane %v358, 2
    %v360 = vmax.f32 %v358, %v359
    %v361 = vrot.slane %v360, 1
    %v362 = vmax.f32 %v360, %v361
    %v363 = vsel %vm327, %v275, -inf
    %v364 = vrot.slane %v363, 4
    %v365 = vmax.f32 %v363, %v364
    %v366 = vrot.slane %v365, 2
    %v367 = vmax.f32 %v365, %v366
    %v368 = vrot.slane %v367, 1
    %v369 = vmax.f32 %v367, %v368
    %v370 = vsel %vm327, %v274, -inf
    %v371 = vrot.slane %v370, 4
    %v372 = vmax.f32 %v370, %v371
    %v373 = vrot.slane %v372, 2
    %v374 = vmax.f32 %v372, %v373
    %v375 = vrot.slane %v374, 1
    %v376 = vmax.f32 %v374, %v375
    %v377 = vsel %vm327, %v276, -inf
    %v378 = vrot.slane %v377, 4
    %v379 = vmax.f32 %v377, %v378
    %v380 = vrot.slane %v379, 2
    %v381 = vmax.f32 %v379, %v380
    %v382 = vrot.slane %v381, 1
    %v383 = vmax.f32 %v381, %v382
    %v384 = vsel %vm327, %v284, -inf
    %v385 = vrot.slane %v384, 4
    %v386 = vmax.f32 %v384, %v385
    %v387 = vrot.slane %v386, 2
    %v388 = vmax.f32 %v386, %v387
    %v389 = vrot.slane %v388, 1
    %v390 = vmax.f32 %v388, %v389
    %v391 = vsel %vm327, %v292, -inf
    %v392 = vrot.slane %v391, 4
    %v393 = vmax.f32 %v391, %v392
    %v394 = vrot.slane %v393, 2
    %v395 = vmax.f32 %v393, %v394
    %v396 = vrot.slane %v395, 1
    %v397 = vmax.f32 %v395, %v396
    %v398 = vsel %vm327, %v291, -inf
    %v399 = vrot.slane %v398, 4
    %v400 = vmax.f32 %v398, %v399
    %v401 = vrot.slane %v400, 2
    %v402 = vmax.f32 %v400, %v401
    %v403 = vrot.slane %v402, 1
    %v404 = vmax.f32 %v402, %v403
    %v405 = vsel %vm327, %v293, -inf
    %v406 = vrot.slane %v405, 4
    %v407 = vmax.f32 %v405, %v406
    %v408 = vrot.slane %v407, 2
    %v409 = vmax.f32 %v407, %v408
    %v410 = vrot.slane %v409, 1
    %v411 = vmax.f32 %v409, %v410
    %v412 = vsel %vm327, %v301, -inf
    %v413 = vrot.slane %v412, 4
    %v414 = vmax.f32 %v412, %v413
    %v415 = vrot.slane %v414, 2
    %v416 = vmax.f32 %v414, %v415
    %v417 = vrot.slane %v416, 1
    %v418 = vmax.f32 %v416, %v417
    %v419 = vsel %vm327, %v309, -inf
    %v420 = vrot.slane %v419, 4
    %v421 = vmax.f32 %v419, %v420
    %v422 = vrot.slane %v421, 2
    %v423 = vmax.f32 %v421, %v422
    %v424 = vrot.slane %v423, 1
    %v425 = vmax.f32 %v423, %v424
    %v426 = vsel %vm327, %v308, -inf
    %v427 = vrot.slane %v426, 4
    %v428 = vmax.f32 %v426, %v427
    %v429 = vrot.slane %v428, 2
    %v430 = vmax.f32 %v428, %v429
    %v431 = vrot.slane %v430, 1
    %v432 = vmax.f32 %v430, %v431
    %v433 = vsel %vm327, %v310, -inf
    %v434 = vrot.slane %v433, 4
    %v435 = vmax.f32 %v433, %v434
    %v436 = vrot.slane %v435, 2
    %v437 = vmax.f32 %v435, %v436
    %v438 = vrot.slane %v437, 1
    %v439 = vmax.f32 %v437, %v438
    %vm456 = vcmask 1041409
    %v457 = vsel %vm456, %v341, %v334
    %vm458 = vcmask 1042434
    %v459 = vsel %vm458, %v348, %v457
    %vm460 = vcmask 1043459
    %v461 = vsel %vm460, %v355, %v459
    %vm462 = vcmask 1044484
    %v463 = vsel %vm462, %v362, %v461
    %vm464 = vcmask 1045509
    %v465 = vsel %vm464, %v369, %v463
    %vm466 = vcmask 1046534
    %v467 = vsel %vm466, %v376, %v465
    %vm468 = vcmask 1047559
    %v469 = vsel %vm468, %v383, %v467
    %v470 = vsel %vm456, %v397, %v390
    %v471 = vsel %vm458, %v404, %v470
    %v472 = vsel %vm460, %v411, %v471
    %v473 = vsel %vm462, %v418, %v472
    %v474 = vsel %vm464, %v425, %v473
    %v475 = vsel %vm466, %v432, %v474
    %v476 = vsel %vm468, %v439, %v475
    %479 = vxpose.xlu0.b32.start [1/16] %v469, 128
    %480 = vxpose.xlu0.b32.cont [2/16] %v476, 128
    %481 = vxpose.xlu0.b32.cont [3/16] 0.0, 128
    %482 = vxpose.xlu0.b32.cont [4/16] 0.0, 128
    %483 = vxpose.xlu0.b32.cont [5/16] 0.0, 128
    %484 = vxpose.xlu0.b32.cont [6/16] 0.0, 128
    %485 = vxpose.xlu0.b32.cont [7/16] 0.0, 128
    %486 = vxpose.xlu0.b32.cont [8/16] 0.0, 128
    %487 = vxpose.xlu0.b32.cont [9/16] 0.0, 128
    %488 = vxpose.xlu0.b32.cont [10/16] 0.0, 128
    %489 = vxpose.xlu0.b32.cont [11/16] 0.0, 128
    %490 = vxpose.xlu0.b32.cont [12/16] 0.0, 128
    %491 = vxpose.xlu0.b32.cont [13/16] 0.0, 128
    %492 = vxpose.xlu0.b32.cont [14/16] 0.0, 128
    %493 = vxpose.xlu0.b32.cont [15/16] 0.0, 128
    %494 = vxpose.xlu0.b32.end [16/16] 0.0, 128
    %v495 = vpop.trf.xlu0
    %v496 = vpop.trf.xlu0
    %v497 = vpop.trf.xlu0
    %v498 = vpop.trf.xlu0
    %v499 = vpop.trf.xlu0
    %v500 = vpop.trf.xlu0
    %v501 = vpop.trf.xlu0
    %v502 = vpop.trf.xlu0
    %v503 = vpop.trf.xlu0
    %v504 = vpop.trf.xlu0
    %v505 = vpop.trf.xlu0
    %v506 = vpop.trf.xlu0
    %v507 = vpop.trf.xlu0
    %v508 = vpop.trf.xlu0
    %v509 = vpop.trf.xlu0
    %v510 = vpop.trf.xlu0
    %vm511 = vcmask 64512
    %512 = vst.msk [vmem:[#allocation4] sm:$0xff] %vm511, %v495
    %514 = vrot.lane.b32.xlu0 %v495, 120
    %v515 = vpop.permute.xlu0 %514
    %s517 = scalar_lea.vmem [#allocation4], 8
    %518 = vst.msk [vmem:[%s517] sm:$0xff] %vm511, %v515
    // Predicated region
    $region22: #{downsample_1d_block.1} parent=1 // pred_check
      _
    $region23: #{downsample_1d_block.1} parent=1 // pred_check_branch
      %520 = sbr.rel (0) target = $region25
    $region24: #{downsample_1d_block.1} parent=1 // pred_region
      %s522 = ssub.s32 256, 256
      %523 = vsyncadd [#allocation3], %s522
      %s524 = sshll.u32 [#allocation2], 4
      %s525 = int_to_ptr.vmem [resolvable:$true] %s524
      %530 = dma.vmem_to_hbm [thread:$0]  %s525, 256, %s5, [#allocation3], 128, 128, 8
    $region25: #{downsample_1d_block.1} parent=1 // pred_fallthru
      _
    // Predicated region
    $region26: #{downsample_1d_block.1} parent=1 // pred_check
      _
    $region27: #{downsample_1d_block.1} parent=1 // pred_check_branch
      %532 = sbr.rel (0) target = $region29
    $region28: #{downsample_1d_block.1} parent=1 // pred_region
      %s534 = ssub.s32 256, 256
      %535 = vsyncadd [#allocation5], %s534
      %s536 = sshll.u32 [#allocation4], 4
      %s537 = int_to_ptr.vmem [resolvable:$true] %s536
      %542 = dma.vmem_to_hbm [thread:$0]  %s537, 256, %s6, [#allocation5], 128, 128, 8
    $region29: #{downsample_1d_block.1} parent=1 // pred_fallthru
      _
    // Predicated region
    $region30: #{downsample_1d_block.1} parent=1 // pred_check
      _
    $region31: #{downsample_1d_block.1} parent=1 // pred_check_branch
      %544 = sbr.rel (0) target = $region33
    $region32: #{downsample_1d_block.1} parent=1 // pred_region
      %545 = dma.done [#allocation3], 256
    $region33: #{downsample_1d_block.1} parent=1 // pred_fallthru
      _
    // Predicated region
    $region34: #{downsample_1d_block.1} parent=1 // pred_check
      _
    $region35: #{downsample_1d_block.1} parent=1 // pred_check_branch
      %547 = sbr.rel (0) target = $region37
    $region36: #{downsample_1d_block.1} parent=1 // pred_region
      %548 = dma.done [#allocation5], 256
    $region37: #{downsample_1d_block.1} parent=1 // pred_fallthru
      _
    %549 = vsyncpa [#allocation3], 1
    %550 = vsyncpa [#allocation5], 1

</llo_original>
